<compile_context>
chip_gen: v7x
topology: tpu7x:2x2x1
jax: 0.10.0
libtpu: 0.0.40
codegen_flags: <defaults>
</compile_context>

<pallas_src>
import jax
import jax.numpy as jnp
from jax.experimental import pallas as pl
from jax.experimental.pallas import tpu as pltpu

KSIZE1 = 5
C1 = 8
KSIZE2 = 3
C2 = 14

# VMEM budget for the double-buffered x tile (bytes).  8 MiB keeps us well
# inside v5e's 16 MiB scoped default and v7x's 32 MiB default / 64 MiB phys.
_X_TILE_VMEM_BUDGET = 8 * 1024 * 1024
_B_TILE_CAP = 8192


# --------------------------------------------------------------------------
# Pallas kernel: one batch tile.
#   x_ref : (B_TILE, L) f32  VMEM   (native layout, batch on sublanes)
#   w_ref : (L, 1)      f32  VMEM   (resident effective weight column)
#   b_ref : (1, 1)      f32  SMEM   (effective bias scalar)
#   out   : (B_TILE, 1) f32
# --------------------------------------------------------------------------
def _gemv_kernel(x_ref, w_ref, b_ref, out_ref):
    acc = jnp.dot(x_ref[...], w_ref[...],
                  preferred_element_type=jnp.float32)   # MXU GEMV, streams x
    out_ref[...] = acc + b_ref[0, 0]


# --------------------------------------------------------------------------
# Pure-JAX mirror of the PyTorch forward (correctness reference).
# --------------------------------------------------------------------------
def _layers_forward(x, params):
    w1, b1 = params["w1"], params["b1"]
    w2, b2 = params["w2"], params["b2"]
    wfc, bfc = params["wfc"], params["bfc"]
    B = x.shape[0]
    h = x[:, None, :]                                                    # (B, 1, L)
    h = jax.lax.conv_general_dilated(
        h, w1, window_strides=(1,), padding="VALID",
        dimension_numbers=("NCH", "OIH", "NCH")) + b1[None, :, None]
    Lc = h.shape[-1]
    h = h[:, :, :2 * (Lc // 2)].reshape(B, C1, Lc // 2, 2).mean(-1)      # AvgPool1d(2,2)
    h = jax.lax.conv_general_dilated(
        h, w2, window_strides=(1,), padding="VALID",
        dimension_numbers=("NCH", "OIH", "NCH")) + b2[None, :, None]
    Lc = h.shape[-1]
    h = h[:, :, :2 * (Lc // 2)].reshape(B, C2, Lc // 2, 2).mean(-1)      # AvgPool1d(2,2)
    h = h.reshape(B, -1)                                                 # flatten
    return h @ wfc.T + bfc[None, :]                                      # (B, 1)


def _effective_affine(params, L):
    """Collapse conv1 -> pool -> conv2 -> pool -> fc into (w_eff, b_eff).

    The network is affine, so forward(x) == x @ w_eff + b_eff exactly.
    """
    basis = jnp.concatenate(
        [jnp.zeros((1, L), jnp.float32), jnp.eye(L, dtype=jnp.float32)], axis=0)
    y = _layers_forward(basis, params)           # (L + 1, 1)
    b_eff = y[0, 0]                              # forward(0)
    w_eff = y[1:, 0] - b_eff                     # forward(e_j) - forward(0)
    return w_eff, b_eff


def prepare_effective_params(params, input_size):
    """Run ONCE per parameter set (NOT on the per-call path)."""
    w_eff, b_eff = _effective_affine(params, input_size)
    w_col = w_eff.reshape(input_size, 1).astype(jnp.float32)
    b11 = b_eff.reshape(1, 1).astype(jnp.float32)
    return jax.block_until_ready(w_col), jax.block_until_ready(b11)


# --------------------------------------------------------------------------
# Tile-size selection (static, trace time).
# --------------------------------------------------------------------------
def _choose_b_tile(B, L):
    b_pad8 = -(-B // 8) * 8
    vmem_cap = max(8, (_X_TILE_VMEM_BUDGET // (2 * L * 4)) // 8 * 8)
    cap = min(_B_TILE_CAP, vmem_cap)
    if b_pad8 <= cap:
        return b_pad8                       # whole (row-padded) batch in one tile
    # Large batch: keep >= 2 tiles so v7x's two TensorCores both get work.
    half = -(-(-(-b_pad8 // 2)) // 8) * 8
    return min(cap, half)


# --------------------------------------------------------------------------
# Per-call wrapper: single pallas_call, x in native layout.
# --------------------------------------------------------------------------
@jax.jit
def proposed_model_pallas(x, w_col, b_eff):
    """x: (B, L) float32. w_col: (L, 1). b_eff: (1, 1)."""
    x = x.astype(jnp.float32)
    B, L = x.shape

    b_tile = _choose_b_tile(B, L)
    num_tiles = pl.cdiv(B, b_tile)
    b_pad = num_tiles * b_tile
    if b_pad != B:
        # Pad batch rows only (no transpose, no full extra pass over x).
        x = jnp.zeros((b_pad, L), jnp.float32).at[:B, :].set(x)

    out = pl.pallas_call(
        _gemv_kernel,
        out_shape=jax.ShapeDtypeStruct((b_pad, 1), jnp.float32),
        grid_spec=pltpu.PrefetchScalarGridSpec(
            num_scalar_prefetch=0,
            grid=(num_tiles,),
            in_specs=[
                pl.BlockSpec((b_tile, L), lambda g: (g, 0)),       # x tile, native layout
                pl.BlockSpec((L, 1), lambda g: (0, 0)),            # resident weight column
                pl.BlockSpec(memory_space=pltpu.MemorySpace.SMEM), # bias scalar
            ],
            out_specs=pl.BlockSpec((b_tile, 1), lambda g: (g, 0)),
        ),
        compiler_params=pltpu.CompilerParams(
            # batch tiles are independent -> megacore sharding on v7x
            dimension_semantics=("parallel",)),
    )(x, w_col, b_eff)

    return out[:B]          # padded rows (== b_eff) are sliced away


# --------------------------------------------------------------------------
# Parameter init (PyTorch-shaped)
# --------------------------------------------------------------------------
def init_params(key, input_size):
    L1 = input_size - (KSIZE1 - 1)
    P1n = L1 // 2
    L2 = P1n - (KSIZE2 - 1)
    P2n = L2 // 2
    F = C2 * P2n
    k = jax.random.split(key, 6)
    return {
        "w1": 0.1 * jax.random.normal(k[0], (C1, 1, KSIZE1), jnp.float32),
        "b1": 0.1 * jax.random.normal(k[1], (C1,), jnp.float32),
        "w2": 0.1 * jax.random.normal(k[2], (C2, C1, KSIZE2), jnp.float32),
        "b2": 0.1 * jax.random.normal(k[3], (C2,), jnp.float32),
        "wfc": 0.1 * jax.random.normal(k[4], (1, F), jnp.float32),
        "bfc": 0.1 * jax.random.normal(k[5], (1,), jnp.float32),
    }


if __name__ == "__main__":
    INPUT_SIZE = 32   # fc in-features = ((32 - 4) // 2 - 2) // 2 * 14 = 84
    BATCH = 4

    key = jax.random.PRNGKey(0)
    kx, kp = jax.random.split(key)
    x = jax.random.normal(kx, (BATCH, INPUT_SIZE), jnp.float32)
    params = init_params(kp, INPUT_SIZE)

    # Precompute the collapsed affine map once per parameter set.
    w_col, b_eff = prepare_effective_params(params, INPUT_SIZE)

    out = proposed_model_pallas(x, w_col, b_eff)
    out = jax.block_until_ready(out)

    ref = _layers_forward(x, params)
    assert out.shape == (BATCH, 1), out.shape
    assert jnp.allclose(out, ref, rtol=1e-4, atol=1e-4), (out, ref)

    print("KERNEL_OK")
</pallas_src>

<mosaic_0001>
module attributes {stable_mosaic.version = 11 : i64} {
  func.func @_gemv_kernel(%arg0: i32, %arg1: memref<8x32xf32, #tpu.memory_space<vmem>>, %arg2: memref<32x1xf32, #tpu.memory_space<vmem>>, %arg3: memref<1x1xf32, #tpu.memory_space<smem>>, %arg4: memref<8x1xf32, #tpu.memory_space<vmem>>) attributes {dimension_semantics = [#tpu.dimension_semantics<parallel>], iteration_bounds = array<i64: 1>, scalar_prefetch = 0 : i64, scratch_operands = 0 : i64, tpu.core_type = #tpu.core_type<tc>, window_params = [{transform_indices = @transform_0, window_bounds = array<i64: 8, 32>}, {pipeline_mode = #tpu.pipeline_mode<synchronous>, transform_indices = @transform_1, window_bounds = array<i64: 32, 1>}, {transform_indices = @transform_2, window_bounds = array<i64: 1, 1>}, {transform_indices = @transform_3, window_bounds = array<i64: 8, 1>}]} {
    %c0 = arith.constant 0 : index
    %c0_0 = arith.constant 0 : index
    %0 = vector.load %arg1[%c0, %c0_0] : memref<8x32xf32, #tpu.memory_space<vmem>>, vector<8x32xf32>
    %c0_1 = arith.constant 0 : index
    %c0_2 = arith.constant 0 : index
    %1 = vector.load %arg2[%c0_1, %c0_2] : memref<32x1xf32, #tpu.memory_space<vmem>>, vector<32x1xf32>
    %cst = arith.constant dense<0.000000e+00> : vector<8x1xf32>
    %2 = tpu.matmul %0, %1, %cst {dimension_numbers = #tpu.dot_dimension_numbers<[1], [0], [0], [1], [0, 0, 1, 1], [], []>} : vector<8x32xf32>, vector<32x1xf32>, vector<8x1xf32> -> vector<8x1xf32>
    %c0_3 = arith.constant 0 : index
    %c0_4 = arith.constant 0 : index
    %3 = memref.load %arg3[%c0_3, %c0_4] : memref<1x1xf32, #tpu.memory_space<smem>>
    %4 = vector.broadcast %3 : f32 to vector<8x1xf32>
    %5 = arith.addf %2, %4 : vector<8x1xf32>
    %c0_5 = arith.constant 0 : index
    %c0_6 = arith.constant 0 : index
    %6 = vector.load %arg4[%c0_5, %c0_6] : memref<8x1xf32, #tpu.memory_space<vmem>>, vector<8x1xf32>
    tpu.vector_store %arg4[%c0_5, %c0_6], %5 {strides = array<i32>} : memref<8x1xf32, #tpu.memory_space<vmem>>, vector<8x1xf32>,
    return
  }
  func.func @transform_0(%arg0: i32) -> (i32, i32) {
    %c0_i32 = arith.constant 0 : i32
    %c0_i32_0 = arith.constant 0 : i32
    return %arg0, %c0_i32 : i32, i32
  }
  func.func @transform_1(%arg0: i32) -> (i32, i32) {
    %c0_i32 = arith.constant 0 : i32
    %c0_i32_0 = arith.constant 0 : i32
    %c0_i32_1 = arith.constant 0 : i32
    return %c0_i32, %c0_i32_0 : i32, i32
  }
  func.func @transform_2(%arg0: i32) -> (i32, i32) {
    %c0_i32 = arith.constant 0 : i32
    %c0_i32_0 = arith.constant 0 : i32
    %c0_i32_1 = arith.constant 0 : i32
    return %c0_i32, %c0_i32_0 : i32, i32
  }
  func.func @transform_3(%arg0: i32) -> (i32, i32) {
    %c0_i32 = arith.constant 0 : i32
    %c0_i32_0 = arith.constant 0 : i32
    return %arg0, %c0_i32 : i32, i32
  }
}

</mosaic_0001>

<llo_original>
// kernel: proposed_model_pallas.1
$region0: #{proposed_model_pallas.1}
  #allocation0 [shape = 'u32[]', space=smem, size = 0x4, offset = 0x4, fixed_abs, tag = 'smem constant byte address 0x4 - core index']
  #allocation1 [shape = 'u32[144,128]{1,0:T(1,128)}', space=vmem, size = 0x12000, scoped, tag = 'internal scratch']
  #allocation2 [shape = 'f32[1,1]{1,0:T(1,128)S(6)}', space=smem, size = 0x200, scoped, tag = 'scoped memory for proposed_model_pallas.1']
  %s0 = inlined_call_operand.vmem [shape: f32[8,32], index: 0, kind: input, shape index: {}]
  %s1 = inlined_call_operand.vmem [shape: f32[32,1], index: 1, kind: input, shape index: {}]
  %s2 = inlined_call_operand.<no memory space> [shape: f32[1,1], index: 2, kind: input, shape index: {}]
  %s3 = inlined_call_operand.vmem [shape: f32[8,1], index: 3, kind: output, shape index: {}]
  %s4 = sld [smem:[#allocation0]]
  $region22: #{proposed_model_pallas.1} parent=0
    _
  %s6 = ssub.s32 1, %s4
  %s7 = scalar_select 0, %s6, %s4
  %8 = sst [smem:[#allocation2]] %s2
  // Predicated region
  $region2: #{proposed_model_pallas.1} parent=0 // pred_check
    _
  $region3: #{proposed_model_pallas.1} parent=0 // pred_check_branch
    %10 = sbr.rel (0) target = $region5
  $region4: #{proposed_model_pallas.1} parent=0 // pred_region
    _
  $region5: #{proposed_model_pallas.1} parent=0 // pred_fallthru
    _
  // Predicated region
  $region6: #{proposed_model_pallas.1} parent=0 // pred_check
    _
  $region7: #{proposed_model_pallas.1} parent=0 // pred_check_branch
    %12 = sbr.rel (0) target = $region9
  $region8: #{proposed_model_pallas.1} parent=0 // pred_region
    _
  $region9: #{proposed_model_pallas.1} parent=0 // pred_fallthru
    _
  // Predicated region
  $region10: #{proposed_model_pallas.1} parent=0 // pred_check
    _
  $region11: #{proposed_model_pallas.1} parent=0 // pred_check_branch
    %14 = sbr.rel (0) target = $region13
  $region12: #{proposed_model_pallas.1} parent=0 // pred_region
    _
  $region13: #{proposed_model_pallas.1} parent=0 // pred_fallthru
    _
  %v15 = vld [vmem:[%s0] sm:$0xff]
  %v16 = vld [vmem:[%s1] sm:$0xff]
  %v17 = vld [vmem:[%s1 + $0x8] sm:$0xff]
  %v18 = vld [vmem:[%s1 + $0x10] sm:$0xff]
  %v19 = vld [vmem:[%s1 + $0x18] sm:$0xff]
  %s20 = sld [smem:[#allocation2]]
  %v21 = vstv %s20
  %vm22 = vcmask 261120
  %v24 = vsel %vm22, %v15, 0
  %26 = vmatprep.subr.mxu0 0.0
  %27 = vmatpush1.msra.mxu0 %v16
  %28 = vmatprep.subr.mxu0 0.0
  %29 = vmatpush1.msra.mxu0 %v17
  %30 = vmatprep.subr.mxu0 0.0
  %31 = vmatpush1.msra.mxu0 %v18
  %32 = vmatprep.subr.mxu0 0.0
  %33 = vmatpush1.msra.mxu0 %v19
  %34 = vmatprep.subr.mxu0 0.0
  %35 = vmatpush1.msra.mxu0 0.0
  %36 = vmatprep.subr.mxu0 0.0
  %37 = vmatpush1.msra.mxu0 0.0
  %38 = vmatprep.subr.mxu0 0.0
  %39 = vmatpush1.msra.mxu0 0.0
  %40 = vmatprep.subr.mxu0 0.0
  %41 = vmatpush1.msra.mxu0 0.0
  %42 = vmatprep.subr.mxu0 0.0
  %43 = vmatpush1.msra.mxu0 0.0
  %44 = vmatprep.subr.mxu0 0.0
  %45 = vmatpush1.msra.mxu0 0.0
  %46 = vmatprep.subr.mxu0 0.0
  %47 = vmatpush1.msra.mxu0 0.0
  %48 = vmatprep.subr.mxu0 0.0
  %49 = vmatpush1.msra.mxu0 0.0
  %50 = vmatprep.subr.mxu0 0.0
  %51 = vmatpush1.msra.mxu0 0.0
  %52 = vmatprep.subr.mxu0 0.0
  %53 = vmatpush1.msra.mxu0 0.0
  %54 = vmatprep.subr.mxu0 0.0
  %55 = vmatpush1.msra.mxu0 0.0
  %56 = vmatprep.subr.mxu0 0.0
  %57 = vmatpush1.msra.mxu0 0.0
  %58 = vmatprep.subr.mxu0 0.0
  %59 = vmatpush1.msra.mxu0 0.0
  %60 = vmatprep.subr.mxu0 0.0
  %61 = vmatpush1.msra.mxu0 0.0
  %62 = vmatprep.subr.mxu0 0.0
  %63 = vmatpush1.msra.mxu0 0.0
  %64 = vmatprep.subr.mxu0 0.0
  %65 = vmatpush1.msra.mxu0 0.0
  %66 = vmatprep.subr.mxu0 0.0
  %67 = vmatpush1.msra.mxu0 0.0
  %68 = vmatprep.subr.mxu0 0.0
  %69 = vmatpush1.msra.mxu0 0.0
  %70 = vmatprep.subr.mxu0 0.0
  %71 = vmatpush1.msra.mxu0 0.0
  %72 = vmatprep.subr.mxu0 0.0
  %73 = vmatpush1.msra.mxu0 0.0
  %74 = vmatprep.subr.mxu0 0.0
  %75 = vmatpush1.msra.mxu0 0.0
  %76 = vmatprep.subr.mxu0 0.0
  %77 = vmatpush1.msra.mxu0 0.0
  %78 = vmatprep.subr.mxu0 0.0
  %79 = vmatpush1.msra.mxu0 0.0
  %80 = vmatprep.subr.mxu0 0.0
  %81 = vmatpush1.msra.mxu0 0.0
  %82 = vmatprep.subr.mxu0 0.0
  %83 = vmatpush1.msra.mxu0 0.0
  %84 = vmatprep.subr.mxu0 0.0
  %85 = vmatpush1.msra.mxu0 0.0
  %86 = vmatprep.subr.mxu0 0.0
  %87 = vmatpush1.msra.mxu0 0.0
  %88 = vmatprep.subr.mxu0 0.0
  %89 = vmatpush1.msra.mxu0 0.0
  %90 = vmatprep.mubr.f32.mxu0 0.0
  %91 = vmatmul.mubr.f32.gmra.mrb[0].mxu0 %v24
  %v92 = vpop.f32.mrb[0].mxu0
  %v93 = vadd.f32 %v21, %v92
  %v94 = vpop.f32.mrb[0].mxu0
  %95 = vdwg.mxu0
  %vm96 = vcmask 7168
  %97 = vst.msk [vmem:[%s3] sm:$0xff] %vm96, %v93
  // Predicated region
  $region14: #{proposed_model_pallas.1} parent=0 // pred_check
    _
  $region15: #{proposed_model_pallas.1} parent=0 // pred_check_branch
    %99 = sbr.rel (0) target = $region17
  $region16: #{proposed_model_pallas.1} parent=0 // pred_region
    _
  $region17: #{proposed_model_pallas.1} parent=0 // pred_fallthru
    _
  // Predicated region
  $region18: #{proposed_model_pallas.1} parent=0 // pred_check
    _
  $region19: #{proposed_model_pallas.1} parent=0 // pred_check_branch
    %101 = sbr.rel (0) target = $region21
  $region20: #{proposed_model_pallas.1} parent=0 // pred_region
    _
  $region21: #{proposed_model_pallas.1} parent=0 // pred_fallthru
    _

</llo_original>
